<compile_context>
chip_gen: v7x
topology: tpu7x:2x2x1
jax: 0.10.0
libtpu: 0.0.40
codegen_flags: <defaults>
</compile_context>

<pallas_src>
import jax
import jax.numpy as jnp
from jax.experimental import pallas as pl
from jax.experimental.pallas import tpu as pltpu


def _act(name):
    name = name.lower()
    if name == "gelu":
        return lambda v: jax.nn.gelu(v, approximate=False)
    if name == "leakyrelu":
        return lambda v: jax.nn.leaky_relu(v, negative_slope=0.01)
    return lambda v: jnp.maximum(v, 0.0)  # relu (default)


def _make_kernel(activation):
    act = _act(activation)

    def kernel(x_ref, ab_ref, bb_ref, aa_ref, ba_ref,
               wd_ref, wp_ref, wu_ref,
               gcol_ref, grow_ref, k2col_ref, blk_ref, o_ref):
        # x_ref: (TM, C) rows = TB batch elements x K neighbors, C on lanes.
        xa = x_ref[...] * ab_ref[...] + bb_ref[...]                       # (TM, C)
        # down projection + act
        h = act(jnp.dot(xa, wd_ref[...],
                        preferred_element_type=jnp.float32))              # (TM, mid)
        # per_inv + act (weight columns pre-permuted to m = k2*mid + c)
        p = act(jnp.dot(h, wp_ref[...],
                        preferred_element_type=jnp.float32))              # (TM, mid*K)
        # per-batch-element sum over k1, broadcast back to all K rows of a group
        grp = (gcol_ref[...] == grow_ref[...]).astype(jnp.float32)        # (TM, TM) 0/1
        vb = jnp.dot(grp, p, preferred_element_type=jnp.float32)          # (TM, mid*K)
        # select each row's k2-block of width mid, then up-project + act.
        # wu_ref is W_up^T tiled K times vertically (and pre-scaled by 1/K),
        # so the masked matmul performs block-select + up projection at once.
        sel = (blk_ref[...] == k2col_ref[...]).astype(jnp.float32)        # (TM, mid*K) 0/1
        u = act(jnp.dot(vb * sel, wu_ref[...],
                        preferred_element_type=jnp.float32))              # (TM, C)
        # after-affine
        o_ref[...] = u * aa_ref[...] + ba_ref[...]

    return kernel


def _choose_tb(b, k, target_rows):
    """Largest TB dividing B with TB*K <= target_rows and TB*K % 8 == 0 (or TB==B)."""
    tb_max = max(1, min(b, target_rows // max(k, 1)))
    for tb in range(tb_max, 0, -1):
        if b % tb:
            continue
        if tb == b or (tb * k) % 8 == 0:
            return tb
    return b  # fall back to one whole-batch tile (block == full array)


def pilinear_forward(x, params, *, reduction, scale=True, activation="relu",
                     target_rows=256):
    """x: (B, K, C) float32, same axis convention as the torch module."""
    assert reduction > 1, "this script implements the default reduction>1 path"
    b, k, c = x.shape
    mid = c // reduction
    wd = params["down_w"]        # (mid, C)
    wp = params["per_inv_w"]     # (mid*neighbors, mid)
    wu = params["up_w"]          # (C, mid)
    # the torch forward's reshape only works when neighbors == K
    assert wp.shape == (mid * k, mid), "PILinear.forward requires neighbors == K"

    f32 = jnp.float32
    mk = mid * k

    # per-channel affine params as (1, C) rows for the (rows, C) kernel layout
    ab = params["before_alpha"].reshape(1, c).astype(f32)
    bb = params["before_beta"].reshape(1, c).astype(f32)
    aa = params["after_alpha"].reshape(1, c).astype(f32)
    ba = params["after_beta"].reshape(1, c).astype(f32)

    # pre-transposed / pre-permuted weights (done once, outside the kernel)
    wdT = jnp.transpose(wd).astype(f32)                        # (C, mid)
    m_idx = jnp.arange(mk)
    perm = (m_idx % mid) * k + (m_idx // mid)                  # new col m=k2*mid+c <- old n=c*K+k2
    wpT = jnp.transpose(wp[perm, :]).astype(f32)               # (mid, mid*K), columns permuted
    wuT = jnp.transpose(wu).astype(f32)                        # (mid, C)
    if scale:
        wuT = wuT / k                                          # fold 1/K into the weight
    wuT_tiled = jnp.tile(wuT, (k, 1))                          # (mid*K, C): row m -> wuT[m % mid]

    # row-block tiling of the flattened (B*K, C) tensor
    tb = _choose_tb(b, k, target_rows)
    tm = tb * k
    bk = b * k
    grid = (bk // tm,)

    # tiny index vectors used to build the 0/1 group / block-select masks in-kernel
    rows = jnp.arange(tm, dtype=jnp.int32)
    gcol = (rows // k).reshape(tm, 1)                          # local batch-element id per row
    grow = (rows // k).reshape(1, tm)
    k2col = (rows % k).reshape(tm, 1)                          # k2 per row
    blk = (jnp.arange(mk, dtype=jnp.int32) // mid).reshape(1, mk)   # k2 block id per column

    x2 = x.reshape(bk, c).astype(f32)                          # free view, no transpose

    def full2(arr):
        return pl.BlockSpec(arr.shape, lambda i: (0, 0))

    out2 = pl.pallas_call(
        _make_kernel(activation),
        out_shape=jax.ShapeDtypeStruct((bk, c), f32),
        grid=grid,
        in_specs=[
            pl.BlockSpec((tm, c), lambda i: (i, 0)),           # x row-block
            full2(ab), full2(bb), full2(aa), full2(ba),
            full2(wdT), full2(wpT), full2(wuT_tiled),
            full2(gcol), full2(grow), full2(k2col), full2(blk),
        ],
        out_specs=pl.BlockSpec((tm, c), lambda i: (i, 0)),     # lane-dense (C on lanes)
        compiler_params=pltpu.CompilerParams(dimension_semantics=("parallel",)),
    )(x2, ab, bb, aa, ba, wdT, wpT, wuT_tiled, gcol, grow, k2col, blk)

    return out2.reshape(b, k, c)                               # free view, no transpose


def init_params(key, channels, neighbors, reduction):
    """Deterministic parameter init matching the torch __init__ shapes."""
    mid = channels // reduction
    k1, k2, k3 = jax.random.split(key, 3)

    def xavier_normal(kk, fan_out, fan_in):
        std = (2.0 / (fan_in + fan_out)) ** 0.5
        return std * jax.random.normal(kk, (fan_out, fan_in), dtype=jnp.float32)

    return {
        "before_alpha": jnp.ones((channels,), jnp.float32),
        "before_beta": jnp.zeros((channels,), jnp.float32),
        "after_alpha": jnp.ones((channels,), jnp.float32),
        "after_beta": jnp.zeros((channels,), jnp.float32),
        "down_w": xavier_normal(k1, mid, channels),               # nn.Linear(C, mid)
        "per_inv_w": xavier_normal(k2, mid * neighbors, mid),     # nn.Linear(mid, mid*nbrs)
        "up_w": xavier_normal(k3, channels, mid),                 # nn.Linear(mid, C)
    }


def pilinear_ref(x, params, *, reduction, scale=True, activation="relu"):
    """Pure-JAX reference mirroring the torch forward exactly (for verification)."""
    act = _act(activation)
    b, k, c = x.shape
    xa = x * params["before_alpha"][None, None, :] + params["before_beta"][None, None, :]
    h = act(jnp.einsum("bkc,mc->bkm", xa, params["down_w"]))
    mid = h.shape[-1]
    p = act(jnp.einsum("bkm,nm->bkn", h, params["per_inv_w"]))
    t = p.reshape(b, k, mid, k).sum(axis=1)        # (b, mid, k)
    y = jnp.transpose(t, (0, 2, 1))                # (b, k, mid)
    if scale:
        y = y / k
    z = act(jnp.einsum("bkm,cm->bkc", y, params["up_w"]))
    return z * params["after_alpha"][None, None, :] + params["after_beta"][None, None, :]


if __name__ == "__main__":
    B, K, C, RED = 2, 8, 64, 16          # batch=2, neighbors/seq=8, channels=64, reduction=16
    key = jax.random.PRNGKey(0)
    kx, kp = jax.random.split(key)
    x = jax.random.normal(kx, (B, K, C), dtype=jnp.float32)
    params = init_params(kp, C, K, RED)  # neighbors == K (required by the torch reshape)

    out = pilinear_forward(x, params, reduction=RED, scale=True, activation="relu")
    out = jax.block_until_ready(out)

    ref = pilinear_ref(x, params, reduction=RED, scale=True, activation="relu")
    assert out.shape == (B, K, C)
    assert jnp.allclose(out, ref, atol=2e-4, rtol=2e-4), float(jnp.max(jnp.abs(out - ref)))
    print("KERNEL_OK")
</pallas_src>

<mosaic_0001>
module attributes {stable_mosaic.version = 11 : i64} {
  func.func @kernel(%arg0: i32, %arg1: memref<16x64xf32, #tpu.memory_space<vmem>>, %arg2: memref<1x64xf32, #tpu.memory_space<vmem>>, %arg3: memref<1x64xf32, #tpu.memory_space<vmem>>, %arg4: memref<1x64xf32, #tpu.memory_space<vmem>>, %arg5: memref<1x64xf32, #tpu.memory_space<vmem>>, %arg6: memref<64x4xf32, #tpu.memory_space<vmem>>, %arg7: memref<4x32xf32, #tpu.memory_space<vmem>>, %arg8: memref<32x64xf32, #tpu.memory_space<vmem>>, %arg9: memref<16x1xi32, #tpu.memory_space<vmem>>, %arg10: memref<1x16xi32, #tpu.memory_space<vmem>>, %arg11: memref<16x1xi32, #tpu.memory_space<vmem>>, %arg12: memref<1x32xi32, #tpu.memory_space<vmem>>, %arg13: memref<16x64xf32, #tpu.memory_space<vmem>>) attributes {dimension_semantics = [#tpu.dimension_semantics<parallel>], iteration_bounds = array<i64: 1>, scalar_prefetch = 0 : i64, scratch_operands = 0 : i64, tpu.core_type = #tpu.core_type<tc>, window_params = [{transform_indices = @transform_0, window_bounds = array<i64: 16, 64>}, {pipeline_mode = #tpu.pipeline_mode<synchronous>, transform_indices = @transform_1, window_bounds = array<i64: 1, 64>}, {pipeline_mode = #tpu.pipeline_mode<synchronous>, transform_indices = @transform_2, window_bounds = array<i64: 1, 64>}, {pipeline_mode = #tpu.pipeline_mode<synchronous>, transform_indices = @transform_3, window_bounds = array<i64: 1, 64>}, {pipeline_mode = #tpu.pipeline_mode<synchronous>, transform_indices = @transform_4, window_bounds = array<i64: 1, 64>}, {pipeline_mode = #tpu.pipeline_mode<synchronous>, transform_indices = @transform_5, window_bounds = array<i64: 64, 4>}, {pipeline_mode = #tpu.pipeline_mode<synchronous>, transform_indices = @transform_6, window_bounds = array<i64: 4, 32>}, {pipeline_mode = #tpu.pipeline_mode<synchronous>, transform_indices = @transform_7, window_bounds = array<i64: 32, 64>}, {pipeline_mode = #tpu.pipeline_mode<synchronous>, transform_indices = @transform_8, window_bounds = array<i64: 16, 1>}, {pipeline_mode = #tpu.pipeline_mode<synchronous>, transform_indices = @transform_9, window_bounds = array<i64: 1, 16>}, {pipeline_mode = #tpu.pipeline_mode<synchronous>, transform_indices = @transform_10, window_bounds = array<i64: 16, 1>}, {pipeline_mode = #tpu.pipeline_mode<synchronous>, transform_indices = @transform_11, window_bounds = array<i64: 1, 32>}, {transform_indices = @transform_12, window_bounds = array<i64: 16, 64>}]} {
    %c0 = arith.constant 0 : index
    %c0_0 = arith.constant 0 : index
    %0 = vector.load %arg1[%c0, %c0_0] : memref<16x64xf32, #tpu.memory_space<vmem>>, vector<16x64xf32>
    %c0_1 = arith.constant 0 : index
    %c0_2 = arith.constant 0 : index
    %1 = vector.load %arg2[%c0_1, %c0_2] : memref<1x64xf32, #tpu.memory_space<vmem>>, vector<1x64xf32>
    %2 = vector.broadcast %1 : vector<1x64xf32> to vector<16x64xf32>
    %3 = arith.mulf %0, %2 : vector<16x64xf32>
    %c0_3 = arith.constant 0 : index
    %c0_4 = arith.constant 0 : index
    %4 = vector.load %arg3[%c0_3, %c0_4] : memref<1x64xf32, #tpu.memory_space<vmem>>, vector<1x64xf32>
    %5 = vector.broadcast %4 : vector<1x64xf32> to vector<16x64xf32>
    %6 = arith.addf %3, %5 : vector<16x64xf32>
    %c0_5 = arith.constant 0 : index
    %c0_6 = arith.constant 0 : index
    %7 = vector.load %arg6[%c0_5, %c0_6] : memref<64x4xf32, #tpu.memory_space<vmem>>, vector<64x4xf32>
    %cst = arith.constant dense<0.000000e+00> : vector<16x4xf32>
    %8 = tpu.matmul %6, %7, %cst {dimension_numbers = #tpu.dot_dimension_numbers<[1], [0], [0], [1], [0, 0, 1, 1], [], []>} : vector<16x64xf32>, vector<64x4xf32>, vector<16x4xf32> -> vector<16x4xf32>
    %cst_7 = arith.constant 0.000000e+00 : f32
    %9 = vector.broadcast %cst_7 : f32 to vector<16x4xf32>
    %10 = arith.maximumf %8, %9 : vector<16x4xf32>
    %c0_8 = arith.constant 0 : index
    %c0_9 = arith.constant 0 : index
    %11 = vector.load %arg7[%c0_8, %c0_9] : memref<4x32xf32, #tpu.memory_space<vmem>>, vector<4x32xf32>
    %cst_10 = arith.constant dense<0.000000e+00> : vector<16x32xf32>
    %12 = tpu.matmul %10, %11, %cst_10 {dimension_numbers = #tpu.dot_dimension_numbers<[1], [0], [0], [1], [0, 0, 1, 1], [], []>} : vector<16x4xf32>, vector<4x32xf32>, vector<16x32xf32> -> vector<16x32xf32>
    %cst_11 = arith.constant 0.000000e+00 : f32
    %13 = vector.broadcast %cst_11 : f32 to vector<16x32xf32>
    %14 = arith.maximumf %12, %13 : vector<16x32xf32>
    %c0_12 = arith.constant 0 : index
    %c0_13 = arith.constant 0 : index
    %15 = vector.load %arg9[%c0_12, %c0_13] : memref<16x1xi32, #tpu.memory_space<vmem>>, vector<16x1xi32>
    %c0_14 = arith.constant 0 : index
    %c0_15 = arith.constant 0 : index
    %16 = vector.load %arg10[%c0_14, %c0_15] : memref<1x16xi32, #tpu.memory_space<vmem>>, vector<1x16xi32>
    %17 = vector.broadcast %15 : vector<16x1xi32> to vector<16x16xi32>
    %18 = vector.broadcast %16 : vector<1x16xi32> to vector<16x16xi32>
    %19 = arith.cmpi eq, %17, %18 : vector<16x16xi32>
    %20 = arith.extui %19 : vector<16x16xi1> to vector<16x16xi32>
    %21 = arith.sitofp %20 : vector<16x16xi32> to vector<16x16xf32>
    %cst_16 = arith.constant dense<0.000000e+00> : vector<16x32xf32>
    %22 = tpu.matmul %21, %14, %cst_16 {dimension_numbers = #tpu.dot_dimension_numbers<[1], [0], [0], [1], [0, 0, 1, 1], [], []>} : vector<16x16xf32>, vector<16x32xf32>, vector<16x32xf32> -> vector<16x32xf32>
    %c0_17 = arith.constant 0 : index
    %c0_18 = arith.constant 0 : index
    %23 = vector.load %arg12[%c0_17, %c0_18] : memref<1x32xi32, #tpu.memory_space<vmem>>, vector<1x32xi32>
    %c0_19 = arith.constant 0 : index
    %c0_20 = arith.constant 0 : index
    %24 = vector.load %arg11[%c0_19, %c0_20] : memref<16x1xi32, #tpu.memory_space<vmem>>, vector<16x1xi32>
    %25 = vector.broadcast %23 : vector<1x32xi32> to vector<16x32xi32>
    %26 = vector.broadcast %24 : vector<16x1xi32> to vector<16x32xi32>
    %27 = arith.cmpi eq, %25, %26 : vector<16x32xi32>
    %28 = arith.extui %27 : vector<16x32xi1> to vector<16x32xi32>
    %29 = arith.sitofp %28 : vector<16x32xi32> to vector<16x32xf32>
    %30 = arith.mulf %22, %29 : vector<16x32xf32>
    %c0_21 = arith.constant 0 : index
    %c0_22 = arith.constant 0 : index
    %31 = vector.load %arg8[%c0_21, %c0_22] : memref<32x64xf32, #tpu.memory_space<vmem>>, vector<32x64xf32>
    %cst_23 = arith.constant dense<0.000000e+00> : vector<16x64xf32>
    %32 = tpu.matmul %30, %31, %cst_23 {dimension_numbers = #tpu.dot_dimension_numbers<[1], [0], [0], [1], [0, 0, 1, 1], [], []>} : vector<16x32xf32>, vector<32x64xf32>, vector<16x64xf32> -> vector<16x64xf32>
    %cst_24 = arith.constant 0.000000e+00 : f32
    %33 = vector.broadcast %cst_24 : f32 to vector<16x64xf32>
    %34 = arith.maximumf %32, %33 : vector<16x64xf32>
    %c0_25 = arith.constant 0 : index
    %c0_26 = arith.constant 0 : index
    %35 = vector.load %arg4[%c0_25, %c0_26] : memref<1x64xf32, #tpu.memory_space<vmem>>, vector<1x64xf32>
    %36 = vector.broadcast %35 : vector<1x64xf32> to vector<16x64xf32>
    %37 = arith.mulf %34, %36 : vector<16x64xf32>
    %c0_27 = arith.constant 0 : index
    %c0_28 = arith.constant 0 : index
    %38 = vector.load %arg5[%c0_27, %c0_28] : memref<1x64xf32, #tpu.memory_space<vmem>>, vector<1x64xf32>
    %39 = vector.broadcast %38 : vector<1x64xf32> to vector<16x64xf32>
    %40 = arith.addf %37, %39 : vector<16x64xf32>
    %c0_29 = arith.constant 0 : index
    %c0_30 = arith.constant 0 : index
    %41 = vector.load %arg13[%c0_29, %c0_30] : memref<16x64xf32, #tpu.memory_space<vmem>>, vector<16x64xf32>
    tpu.vector_store %arg13[%c0_29, %c0_30], %40 {strides = array<i32>} : memref<16x64xf32, #tpu.memory_space<vmem>>, vector<16x64xf32>,
    return
  }
  func.func @transform_0(%arg0: i32) -> (i32, i32) {
    %c0_i32 = arith.constant 0 : i32
    %c0_i32_0 = arith.constant 0 : i32
    return %arg0, %c0_i32 : i32, i32
  }
  func.func @transform_1(%arg0: i32) -> (i32, i32) {
    %c0_i32 = arith.constant 0 : i32
    %c0_i32_0 = arith.constant 0 : i32
    %c0_i32_1 = arith.constant 0 : i32
    return %c0_i32, %c0_i32_0 : i32, i32
  }
  func.func @transform_2(%arg0: i32) -> (i32, i32) {
    %c0_i32 = arith.constant 0 : i32
    %c0_i32_0 = arith.constant 0 : i32
    %c0_i32_1 = arith.constant 0 : i32
    return %c0_i32, %c0_i32_0 : i32, i32
  }
  func.func @transform_3(%arg0: i32) -> (i32, i32) {
    %c0_i32 = arith.constant 0 : i32
    %c0_i32_0 = arith.constant 0 : i32
    %c0_i32_1 = arith.constant 0 : i32
    return %c0_i32, %c0_i32_0 : i32, i32
  }
  func.func @transform_4(%arg0: i32) -> (i32, i32) {
    %c0_i32 = arith.constant 0 : i32
    %c0_i32_0 = arith.constant 0 : i32
    %c0_i32_1 = arith.constant 0 : i32
    return %c0_i32, %c0_i32_0 : i32, i32
  }
  func.func @transform_5(%arg0: i32) -> (i32, i32) {
    %c0_i32 = arith.constant 0 : i32
    %c0_i32_0 = arith.constant 0 : i32
    %c0_i32_1 = arith.constant 0 : i32
    return %c0_i32, %c0_i32_0 : i32, i32
  }
  func.func @transform_6(%arg0: i32) -> (i32, i32) {
    %c0_i32 = arith.constant 0 : i32
    %c0_i32_0 = arith.constant 0 : i32
    %c0_i32_1 = arith.constant 0 : i32
    return %c0_i32, %c0_i32_0 : i32, i32
  }
  func.func @transform_7(%arg0: i32) -> (i32, i32) {
    %c0_i32 = arith.constant 0 : i32
    %c0_i32_0 = arith.constant 0 : i32
    %c0_i32_1 = arith.constant 0 : i32
    return %c0_i32, %c0_i32_0 : i32, i32
  }
  func.func @transform_8(%arg0: i32) -> (i32, i32) {
    %c0_i32 = arith.constant 0 : i32
    %c0_i32_0 = arith.constant 0 : i32
    %c0_i32_1 = arith.constant 0 : i32
    return %c0_i32, %c0_i32_0 : i32, i32
  }
  func.func @transform_9(%arg0: i32) -> (i32, i32) {
    %c0_i32 = arith.constant 0 : i32
    %c0_i32_0 = arith.constant 0 : i32
    %c0_i32_1 = arith.constant 0 : i32
    return %c0_i32, %c0_i32_0 : i32, i32
  }
  func.func @transform_10(%arg0: i32) -> (i32, i32) {
    %c0_i32 = arith.constant 0 : i32
    %c0_i32_0 = arith.constant 0 : i32
    %c0_i32_1 = arith.constant 0 : i32
    return %c0_i32, %c0_i32_0 : i32, i32
  }
  func.func @transform_11(%arg0: i32) -> (i32, i32) {
    %c0_i32 = arith.constant 0 : i32
    %c0_i32_0 = arith.constant 0 : i32
    %c0_i32_1 = arith.constant 0 : i32
    return %c0_i32, %c0_i32_0 : i32, i32
  }
  func.func @transform_12(%arg0: i32) -> (i32, i32) {
    %c0_i32 = arith.constant 0 : i32
    %c0_i32_0 = arith.constant 0 : i32
    return %arg0, %c0_i32 : i32, i32
  }
}

</mosaic_0001>

<llo_original>
// kernel: tpu_custom_call.1
$region0: #{tpu_custom_call.1}
  #allocation0 [shape = 'u32[]', space=smem, size = 0x4, offset = 0x4, fixed_abs, tag = 'smem constant byte address 0x4 - core index']
  #allocation1 [shape = 'u32[144,128]{1,0:T(1,128)}', space=vmem, size = 0x12000, scoped, tag = 'internal scratch']
  %s0 = inlined_call_operand.vmem [shape: f32[16,64], index: 0, kind: input, shape index: {}]
  %s1 = inlined_call_operand.vmem [shape: f32[1,64], index: 1, kind: input, shape index: {}]
  %s2 = inlined_call_operand.vmem [shape: f32[1,64], index: 2, kind: input, shape index: {}]
  %s3 = inlined_call_operand.vmem [shape: f32[1,64], index: 3, kind: input, shape index: {}]
  %s4 = inlined_call_operand.vmem [shape: f32[1,64], index: 4, kind: input, shape index: {}]
  %s5 = inlined_call_operand.vmem [shape: f32[64,4], index: 5, kind: input, shape index: {}]
  %s6 = inlined_call_operand.vmem [shape: f32[4,32], index: 6, kind: input, shape index: {}]
  %s7 = inlined_call_operand.vmem [shape: f32[32,64], index: 7, kind: input, shape index: {}]
  %s8 = inlined_call_operand.vmem [shape: s32[16,1], index: 8, kind: input, shape index: {}]
  %s9 = inlined_call_operand.vmem [shape: s32[1,16], index: 9, kind: input, shape index: {}]
  %s10 = inlined_call_operand.vmem [shape: s32[16,1], index: 10, kind: input, shape index: {}]
  %s11 = inlined_call_operand.vmem [shape: s32[1,32], index: 11, kind: input, shape index: {}]
  %s12 = inlined_call_operand.hbm [shape: f32[16,64], index: 12, kind: output, shape index: {}]
  %s13 = sld [smem:[#allocation0]]
  $region58: #{tpu_custom_call.1} parent=0
    _
  %s15 = ssub.s32 1, %s13
  %s16 = scalar_select 0, %s15, %s13
  $region1: #{tpu_custom_call.1} parent=0
    #allocation2 [shape = 'u8[8192]{0}', space=vmem, size = 0x2000, scoped, tag = 'output window, operand 0, single buffered']
    #allocation3 [shape = 's32[1]{0}', space=sflag, size = 0x4, scoped, tag = 'scoped memory for tpu_custom_call.1']
    %17 = vsyncpa [#allocation3], 0
    // Predicated region
    $region2: #{tpu_custom_call.1} parent=1 // pred_check
      _
    $region3: #{tpu_custom_call.1} parent=1 // pred_check_branch
      %19 = sbr.rel (0) target = $region5
    $region4: #{tpu_custom_call.1} parent=1 // pred_region
      _
    $region5: #{tpu_custom_call.1} parent=1 // pred_fallthru
      _
    // Predicated region
    $region6: #{tpu_custom_call.1} parent=1 // pred_check
      _
    $region7: #{tpu_custom_call.1} parent=1 // pred_check_branch
      %21 = sbr.rel (0) target = $region9
    $region8: #{tpu_custom_call.1} parent=1 // pred_region
      _
    $region9: #{tpu_custom_call.1} parent=1 // pred_fallthru
      _
    // Predicated region
    $region10: #{tpu_custom_call.1} parent=1 // pred_check
      _
    $region11: #{tpu_custom_call.1} parent=1 // pred_check_branch
      %23 = sbr.rel (0) target = $region13
    $region12: #{tpu_custom_call.1} parent=1 // pred_region
      _
    $region13: #{tpu_custom_call.1} parent=1 // pred_fallthru
      _
    // Predicated region
    $region14: #{tpu_custom_call.1} parent=1 // pred_check
      _
    $region15: #{tpu_custom_call.1} parent=1 // pred_check_branch
      %25 = sbr.rel (0) target = $region17
    $region16: #{tpu_custom_call.1} parent=1 // pred_region
      _
    $region17: #{tpu_custom_call.1} parent=1 // pred_fallthru
      _
    // Predicated region
    $region18: #{tpu_custom_call.1} parent=1 // pred_check
      _
    $region19: #{tpu_custom_call.1} parent=1 // pred_check_branch
      %27 = sbr.rel (0) target = $region21
    $region20: #{tpu_custom_call.1} parent=1 // pred_region
      _
    $region21: #{tpu_custom_call.1} parent=1 // pred_fallthru
      _
    // Predicated region
    $region22: #{tpu_custom_call.1} parent=1 // pred_check
      _
    $region23: #{tpu_custom_call.1} parent=1 // pred_check_branch
      %29 = sbr.rel (0) target = $region25
    $region24: #{tpu_custom_call.1} parent=1 // pred_region
      _
    $region25: #{tpu_custom_call.1} parent=1 // pred_fallthru
      _
    // Predicated region
    $region26: #{tpu_custom_call.1} parent=1 // pred_check
      _
    $region27: #{tpu_custom_call.1} parent=1 // pred_check_branch
      %31 = sbr.rel (0) target = $region29
    $region28: #{tpu_custom_call.1} parent=1 // pred_region
      _
    $region29: #{tpu_custom_call.1} parent=1 // pred_fallthru
      _
    // Predicated region
    $region30: #{tpu_custom_call.1} parent=1 // pred_check
      _
    $region31: #{tpu_custom_call.1} parent=1 // pred_check_branch
      %33 = sbr.rel (0) target = $region33
    $region32: #{tpu_custom_call.1} parent=1 // pred_region
      _
    $region33: #{tpu_custom_call.1} parent=1 // pred_fallthru
      _
    // Predicated region
    $region34: #{tpu_custom_call.1} parent=1 // pred_check
      _
    $region35: #{tpu_custom_call.1} parent=1 // pred_check_branch
      %35 = sbr.rel (0) target = $region37
    $region36: #{tpu_custom_call.1} parent=1 // pred_region
      _
    $region37: #{tpu_custom_call.1} parent=1 // pred_fallthru
      _
    // Predicated region
    $region38: #{tpu_custom_call.1} parent=1 // pred_check
      _
    $region39: #{tpu_custom_call.1} parent=1 // pred_check_branch
      %37 = sbr.rel (0) target = $region41
    $region40: #{tpu_custom_call.1} parent=1 // pred_region
      _
    $region41: #{tpu_custom_call.1} parent=1 // pred_fallthru
      _
    // Predicated region
    $region42: #{tpu_custom_call.1} parent=1 // pred_check
      _
    $region43: #{tpu_custom_call.1} parent=1 // pred_check_branch
      %39 = sbr.rel (0) target = $region45
    $region44: #{tpu_custom_call.1} parent=1 // pred_region
      _
    $region45: #{tpu_custom_call.1} parent=1 // pred_fallthru
      _
    // Predicated region
    $region46: #{tpu_custom_call.1} parent=1 // pred_check
      _
    $region47: #{tpu_custom_call.1} parent=1 // pred_check_branch
      %41 = sbr.rel (0) target = $region49
    $region48: #{tpu_custom_call.1} parent=1 // pred_region
      _
    $region49: #{tpu_custom_call.1} parent=1 // pred_fallthru
      _
    %v42 = vld [vmem:[%s0] sm:$0xff]
    %v43 = vld [vmem:[%s0 + $0x8] sm:$0xff]
    %v44 = vld [vmem:[%s1] sm:$0x1]
    %v46 = vlaneseq
    %v47 = vshrl.u32 %v46, 7
    %v48 = vsub.s32 0, %v47
    %v49 = vrot.slane %v44, %v48
    %v51 = vmul.f32 %v42, %v49
    %v52 = vmul.f32 %v43, %v49
    %v53 = vld [vmem:[%s2] sm:$0x1]
    %v55 = vlaneseq
    %v56 = vshrl.u32 %v55, 7
    %v57 = vsub.s32 0, %v56
    %v58 = vrot.slane %v53, %v57
    %v60 = vadd.f32 %v51, %v58
    %v61 = vadd.f32 %v52, %v58
    %v62 = vld [vmem:[%s5] sm:$0xff]
    %v63 = vld [vmem:[%s5 + $0x8] sm:$0xff]
    %v64 = vld [vmem:[%s5 + $0x10] sm:$0xff]
    %v65 = vld [vmem:[%s5 + $0x18] sm:$0xff]
    %v66 = vld [vmem:[%s5 + $0x20] sm:$0xff]
    %v67 = vld [vmem:[%s5 + $0x28] sm:$0xff]
    %v68 = vld [vmem:[%s5 + $0x30] sm:$0xff]
    %v69 = vld [vmem:[%s5 + $0x38] sm:$0xff]
    %vm70 = vcmask 523264
    %v72 = vsel %vm70, %v60, 0
    %v75 = vsel %vm70, %v61, 0
    %77 = vmatprep.subr.mxu0 0.0
    %78 = vmatpush1.msra.mxu0 %v62
    %79 = vmatprep.subr.mxu0 0.0
    %80 = vmatpush1.msra.mxu0 %v63
    %81 = vmatprep.subr.mxu0 0.0
    %82 = vmatpush1.msra.mxu0 %v64
    %83 = vmatprep.subr.mxu0 0.0
    %84 = vmatpush1.msra.mxu0 %v65
    %85 = vmatprep.subr.mxu0 0.0
    %86 = vmatpush1.msra.mxu0 %v66
    %87 = vmatprep.subr.mxu0 0.0
    %88 = vmatpush1.msra.mxu0 %v67
    %89 = vmatprep.subr.mxu0 0.0
    %90 = vmatpush1.msra.mxu0 %v68
    %91 = vmatprep.subr.mxu0 0.0
    %92 = vmatpush1.msra.mxu0 %v69
    %93 = vmatprep.subr.mxu0 0.0
    %94 = vmatpush1.msra.mxu0 0.0
    %95 = vmatprep.subr.mxu0 0.0
    %96 = vmatpush1.msra.mxu0 0.0
    %97 = vmatprep.subr.mxu0 0.0
    %98 = vmatpush1.msra.mxu0 0.0
    %99 = vmatprep.subr.mxu0 0.0
    %100 = vmatpush1.msra.mxu0 0.0
    %101 = vmatprep.subr.mxu0 0.0
    %102 = vmatpush1.msra.mxu0 0.0
    %103 = vmatprep.subr.mxu0 0.0
    %104 = vmatpush1.msra.mxu0 0.0
    %105 = vmatprep.subr.mxu0 0.0
    %106 = vmatpush1.msra.mxu0 0.0
    %107 = vmatprep.subr.mxu0 0.0
    %108 = vmatpush1.msra.mxu0 0.0
    %109 = vmatprep.subr.mxu0 0.0
    %110 = vmatpush1.msra.mxu0 0.0
    %111 = vmatprep.subr.mxu0 0.0
    %112 = vmatpush1.msra.mxu0 0.0
    %113 = vmatprep.subr.mxu0 0.0
    %114 = vmatpush1.msra.mxu0 0.0
    %115 = vmatprep.subr.mxu0 0.0
    %116 = vmatpush1.msra.mxu0 0.0
    %117 = vmatprep.subr.mxu0 0.0
    %118 = vmatpush1.msra.mxu0 0.0
    %119 = vmatprep.subr.mxu0 0.0
    %120 = vmatpush1.msra.mxu0 0.0
    %121 = vmatprep.subr.mxu0 0.0
    %122 = vmatpush1.msra.mxu0 0.0
    %123 = vmatprep.subr.mxu0 0.0
    %124 = vmatpush1.msra.mxu0 0.0
    %125 = vmatprep.subr.mxu0 0.0
    %126 = vmatpush1.msra.mxu0 0.0
    %127 = vmatprep.subr.mxu0 0.0
    %128 = vmatpush1.msra.mxu0 0.0
    %129 = vmatprep.subr.mxu0 0.0
    %130 = vmatpush1.msra.mxu0 0.0
    %131 = vmatprep.subr.mxu0 0.0
    %132 = vmatpush1.msra.mxu0 0.0
    %133 = vmatprep.subr.mxu0 0.0
    %134 = vmatpush1.msra.mxu0 0.0
    %135 = vmatprep.subr.mxu0 0.0
    %136 = vmatpush1.msra.mxu0 0.0
    %137 = vmatprep.subr.mxu0 0.0
    %138 = vmatpush1.msra.mxu0 0.0
    %139 = vmatprep.subr.mxu0 0.0
    %140 = vmatpush1.msra.mxu0 0.0
    %141 = vmatprep.mubr.f32.mxu0 0.0
    %142 = vmatmul.mubr.f32.gmra.mrb[0].mxu0 %v72
    %v143 = vpop.f32.mrb[0].mxu0
    %v144 = vadd.f32 0.0, %v143
    %v145 = vpop.f32.mrb[0].mxu0
    %146 = vmatprep.mubr.f32.mxu0 0.0
    %147 = vmatmul.mubr.f32.gmra.mrb[0].mxu0 %v75
    %v148 = vpop.f32.mrb[0].mxu0
    %v149 = vadd.f32 0.0, %v148
    %v150 = vpop.f32.mrb[0].mxu0
    %151 = vdwg.mxu0
    %v152 = vmax.f32 %v144, 0.0
    %v153 = vmax.f32 %v149, 0.0
    %v154 = vld [vmem:[%s6] sm:$0xf]
    %vm155 = vcmask 31744
    %v157 = vsel %vm155, %v152, 0
    %v160 = vsel %vm155, %v153, 0
    %vm162 = vcmask 1043456
    %v164 = vsel %vm162, %v154, 0
    %166 = vmatprep.subr.mxu0 0.0
    %167 = vmatpush1.msra.mxu0 %v164
    %168 = vmatprep.subr.mxu0 0.0
    %169 = vmatpush1.msra.mxu0 0.0
    %170 = vmatprep.subr.mxu0 0.0
    %171 = vmatpush1.msra.mxu0 0.0
    %172 = vmatprep.subr.mxu0 0.0
    %173 = vmatpush1.msra.mxu0 0.0
    %174 = vmatprep.subr.mxu0 0.0
    %175 = vmatpush1.msra.mxu0 0.0
    %176 = vmatprep.subr.mxu0 0.0
    %177 = vmatpush1.msra.mxu0 0.0
    %178 = vmatprep.subr.mxu0 0.0
    %179 = vmatpush1.msra.mxu0 0.0
    %180 = vmatprep.subr.mxu0 0.0
    %181 = vmatpush1.msra.mxu0 0.0
    %182 = vmatprep.subr.mxu0 0.0
    %183 = vmatpush1.msra.mxu0 0.0
    %184 = vmatprep.subr.mxu0 0.0
    %185 = vmatpush1.msra.mxu0 0.0
    %186 = vmatprep.subr.mxu0 0.0
    %187 = vmatpush1.msra.mxu0 0.0
    %188 = vmatprep.subr.mxu0 0.0
    %189 = vmatpush1.msra.mxu0 0.0
    %190 = vmatprep.subr.mxu0 0.0
    %191 = vmatpush1.msra.mxu0 0.0
    %192 = vmatprep.subr.mxu0 0.0
    %193 = vmatpush1.msra.mxu0 0.0
    %194 = vmatprep.subr.mxu0 0.0
    %195 = vmatpush1.msra.mxu0 0.0
    %196 = vmatprep.subr.mxu0 0.0
    %197 = vmatpush1.msra.mxu0 0.0
    %198 = vmatprep.subr.mxu0 0.0
    %199 = vmatpush1.msra.mxu0 0.0
    %200 = vmatprep.subr.mxu0 0.0
    %201 = vmatpush1.msra.mxu0 0.0
    %202 = vmatprep.subr.mxu0 0.0
    %203 = vmatpush1.msra.mxu0 0.0
    %204 = vmatprep.subr.mxu0 0.0
    %205 = vmatpush1.msra.mxu0 0.0
    %206 = vmatprep.subr.mxu0 0.0
    %207 = vmatpush1.msra.mxu0 0.0
    %208 = vmatprep.subr.mxu0 0.0
    %209 = vmatpush1.msra.mxu0 0.0
    %210 = vmatprep.subr.mxu0 0.0
    %211 = vmatpush1.msra.mxu0 0.0
    %212 = vmatprep.subr.mxu0 0.0
    %213 = vmatpush1.msra.mxu0 0.0
    %214 = vmatprep.subr.mxu0 0.0
    %215 = vmatpush1.msra.mxu0 0.0
    %216 = vmatprep.subr.mxu0 0.0
    %217 = vmatpush1.msra.mxu0 0.0
    %218 = vmatprep.subr.mxu0 0.0
    %219 = vmatpush1.msra.mxu0 0.0
    %220 = vmatprep.subr.mxu0 0.0
    %221 = vmatpush1.msra.mxu0 0.0
    %222 = vmatprep.subr.mxu0 0.0
    %223 = vmatpush1.msra.mxu0 0.0
    %224 = vmatprep.subr.mxu0 0.0
    %225 = vmatpush1.msra.mxu0 0.0
    %226 = vmatprep.subr.mxu0 0.0
    %227 = vmatpush1.msra.mxu0 0.0
    %228 = vmatprep.subr.mxu0 0.0
    %229 = vmatpush1.msra.mxu0 0.0
    %230 = vmatprep.mubr.f32.mxu0 0.0
    %231 = vmatmul.mubr.f32.gmra.mrb[0].mxu0 %v157
    %v232 = vpop.f32.mrb[0].mxu0
    %v233 = vadd.f32 0.0, %v232
    %v234 = vpop.f32.mrb[0].mxu0
    %235 = vmatprep.mubr.f32.mxu0 0.0
    %236 = vmatmul.mubr.f32.gmra.mrb[0].mxu0 %v160
    %v237 = vpop.f32.mrb[0].mxu0
    %v238 = vadd.f32 0.0, %v237
    %v239 = vpop.f32.mrb[0].mxu0
    %240 = vdwg.mxu0
    %v241 = vmax.f32 %v233, 0.0
    %v242 = vmax.f32 %v238, 0.0
    %v243 = vld [vmem:[%s8] sm:$0xff]
    %v244 = vld [vmem:[%s8 + $0x8] sm:$0xff]
    %v245 = vld [vmem:[%s9] sm:$0x1]
    %246 = vset.pattern.permute.xlu0 0
    %247 = vperm.xlu0 %246, %v243
    %v248 = vpop.permute.xlu0 %247
    %249 = vset.pattern.permute.xlu0 0
    %250 = vperm.xlu0 %249, %v244
    %v251 = vpop.permute.xlu0 %250
    %v252 = vlaneseq
    %v253 = vshrl.u32 %v252, 7
    %v254 = vsub.s32 0, %v253
    %v255 = vrot.slane %v245, %v254
    %vm256 = vcmp.eq.s32.totalorder %v248, %v255
    %vm257 = vcmp.eq.s32.totalorder %v251, %v255
    %v258 = vsel %vm256, 1, 0
    %v259 = vsel %vm257, 1, 0
    %v260 = vcvt.s32.f32 %v258
    %v261 = vcvt.s32.f32 %v259
    %vm262 = vcmask 130048
    %v264 = vsel %vm262, %v260, 0
    %v267 = vsel %vm262, %v261, 0
    %269 = vmatprep.subr.mxu0 0.0
    %270 = vmatpush1.msra.mxu0 %v241
    %271 = vmatprep.subr.mxu0 0.0
    %272 = vmatpush1.msra.mxu0 %v242
    %273 = vmatprep.subr.mxu0 0.0
    %274 = vmatpush1.msra.mxu0 0.0
    %275 = vmatprep.subr.mxu0 0.0
    %276 = vmatpush1.msra.mxu0 0.0
    %277 = vmatprep.subr.mxu0 0.0
    %278 = vmatpush1.msra.mxu0 0.0
    %279 = vmatprep.subr.mxu0 0.0
    %280 = vmatpush1.msra.mxu0 0.0
    %281 = vmatprep.subr.mxu0 0.0
    %282 = vmatpush1.msra.mxu0 0.0
    %283 = vmatprep.subr.mxu0 0.0
    %284 = vmatpush1.msra.mxu0 0.0
    %285 = vmatprep.subr.mxu0 0.0
    %286 = vmatpush1.msra.mxu0 0.0
    %287 = vmatprep.subr.mxu0 0.0
    %288 = vmatpush1.msra.mxu0 0.0
    %289 = vmatprep.subr.mxu0 0.0
    %290 = vmatpush1.msra.mxu0 0.0
    %291 = vmatprep.subr.mxu0 0.0
    %292 = vmatpush1.msra.mxu0 0.0
    %293 = vmatprep.subr.mxu0 0.0
    %294 = vmatpush1.msra.mxu0 0.0
    %295 = vmatprep.subr.mxu0 0.0
    %296 = vmatpush1.msra.mxu0 0.0
    %297 = vmatprep.subr.mxu0 0.0
    %298 = vmatpush1.msra.mxu0 0.0
    %299 = vmatprep.subr.mxu0 0.0
    %300 = vmatpush1.msra.mxu0 0.0
    %301 = vmatprep.subr.mxu0 0.0
    %302 = vmatpush1.msra.mxu0 0.0
    %303 = vmatprep.subr.mxu0 0.0
    %304 = vmatpush1.msra.mxu0 0.0
    %305 = vmatprep.subr.mxu0 0.0
    %306 = vmatpush1.msra.mxu0 0.0
    %307 = vmatprep.subr.mxu0 0.0
    %308 = vmatpush1.msra.mxu0 0.0
    %309 = vmatprep.subr.mxu0 0.0
    %310 = vmatpush1.msra.mxu0 0.0
    %311 = vmatprep.subr.mxu0 0.0
    %312 = vmatpush1.msra.mxu0 0.0
    %313 = vmatprep.subr.mxu0 0.0
    %314 = vmatpush1.msra.mxu0 0.0
    %315 = vmatprep.subr.mxu0 0.0
    %316 = vmatpush1.msra.mxu0 0.0
    %317 = vmatprep.subr.mxu0 0.0
    %318 = vmatpush1.msra.mxu0 0.0
    %319 = vmatprep.subr.mxu0 0.0
    %320 = vmatpush1.msra.mxu0 0.0
    %321 = vmatprep.subr.mxu0 0.0
    %322 = vmatpush1.msra.mxu0 0.0
    %323 = vmatprep.subr.mxu0 0.0
    %324 = vmatpush1.msra.mxu0 0.0
    %325 = vmatprep.subr.mxu0 0.0
    %326 = vmatpush1.msra.mxu0 0.0
    %327 = vmatprep.subr.mxu0 0.0
    %328 = vmatpush1.msra.mxu0 0.0
    %329 = vmatprep.subr.mxu0 0.0
    %330 = vmatpush1.msra.mxu0 0.0
    %331 = vmatprep.subr.mxu0 0.0
    %332 = vmatpush1.msra.mxu0 0.0
    %333 = vmatprep.mubr.f32.mxu0 0.0
    %334 = vmatmul.mubr.f32.gmra.mrb[0].mxu0 %v264
    %v335 = vpop.f32.mrb[0].mxu0
    %v336 = vadd.f32 0.0, %v335
    %v337 = vpop.f32.mrb[0].mxu0
    %338 = vmatprep.mubr.f32.mxu0 0.0
    %339 = vmatmul.mubr.f32.gmra.mrb[0].mxu0 %v267
    %v340 = vpop.f32.mrb[0].mxu0
    %v341 = vadd.f32 0.0, %v340
    %v342 = vpop.f32.mrb[0].mxu0
    %343 = vdwg.mxu0
    %v344 = vld [vmem:[%s11] sm:$0x1]
    %v345 = vld [vmem:[%s10] sm:$0xff]
    %v346 = vld [vmem:[%s10 + $0x8] sm:$0xff]
    %v347 = vlaneseq
    %v348 = vshrl.u32 %v347, 7
    %v349 = vsub.s32 0, %v348
    %v350 = vrot.slane %v344, %v349
    %351 = vset.pattern.permute.xlu0 0
    %352 = vperm.xlu0 %351, %v345
    %v353 = vpop.permute.xlu0 %352
    %354 = vset.pattern.permute.xlu0 0
    %355 = vperm.xlu0 %354, %v346
    %v356 = vpop.permute.xlu0 %355
    %vm357 = vcmp.eq.s32.totalorder %v350, %v353
    %vm358 = vcmp.eq.s32.totalorder %v350, %v356
    %v359 = vsel %vm357, 1, 0
    %v360 = vsel %vm358, 1, 0
    %v361 = vcvt.s32.f32 %v359
    %v362 = vcvt.s32.f32 %v360
    %v363 = vmul.f32 %v336, %v361
    %v364 = vmul.f32 %v341, %v362
    %v365 = vld [vmem:[%s7] sm:$0xff]
    %v366 = vld [vmem:[%s7 + $0x8] sm:$0xff]
    %v367 = vld [vmem:[%s7 + $0x10] sm:$0xff]
    %v368 = vld [vmem:[%s7 + $0x18] sm:$0xff]
    %vm369 = vcmask 261120
    %v371 = vsel %vm369, %v363, 0
    %v374 = vsel %vm369, %v364, 0
    %376 = vmatprep.subr.mxu0 0.0
    %377 = vmatpush1.msra.mxu0 %v365
    %378 = vmatprep.subr.mxu0 0.0
    %379 = vmatpush1.msra.mxu0 %v366
    %380 = vmatprep.subr.mxu0 0.0
    %381 = vmatpush1.msra.mxu0 %v367
    %382 = vmatprep.subr.mxu0 0.0
    %383 = vmatpush1.msra.mxu0 %v368
    %384 = vmatprep.subr.mxu0 0.0
    %385 = vmatpush1.msra.mxu0 0.0
    %386 = vmatprep.subr.mxu0 0.0
    %387 = vmatpush1.msra.mxu0 0.0
    %388 = vmatprep.subr.mxu0 0.0
    %389 = vmatpush1.msra.mxu0 0.0
    %390 = vmatprep.subr.mxu0 0.0
    %391 = vmatpush1.msra.mxu0 0.0
    %392 = vmatprep.subr.mxu0 0.0
    %393 = vmatpush1.msra.mxu0 0.0
    %394 = vmatprep.subr.mxu0 0.0
    %395 = vmatpush1.msra.mxu0 0.0
    %396 = vmatprep.subr.mxu0 0.0
    %397 = vmatpush1.msra.mxu0 0.0
    %398 = vmatprep.subr.mxu0 0.0
    %399 = vmatpush1.msra.mxu0 0.0
    %400 = vmatprep.subr.mxu0 0.0
    %401 = vmatpush1.msra.mxu0 0.0
    %402 = vmatprep.subr.mxu0 0.0
    %403 = vmatpush1.msra.mxu0 0.0
    %404 = vmatprep.subr.mxu0 0.0
    %405 = vmatpush1.msra.mxu0 0.0
    %406 = vmatprep.subr.mxu0 0.0
    %407 = vmatpush1.msra.mxu0 0.0
    %408 = vmatprep.subr.mxu0 0.0
    %409 = vmatpush1.msra.mxu0 0.0
    %410 = vmatprep.subr.mxu0 0.0
    %411 = vmatpush1.msra.mxu0 0.0
    %412 = vmatprep.subr.mxu0 0.0
    %413 = vmatpush1.msra.mxu0 0.0
    %414 = vmatprep.subr.mxu0 0.0
    %415 = vmatpush1.msra.mxu0 0.0
    %416 = vmatprep.subr.mxu0 0.0
    %417 = vmatpush1.msra.mxu0 0.0
    %418 = vmatprep.subr.mxu0 0.0
    %419 = vmatpush1.msra.mxu0 0.0
    %420 = vmatprep.subr.mxu0 0.0
    %421 = vmatpush1.msra.mxu0 0.0
    %422 = vmatprep.subr.mxu0 0.0
    %423 = vmatpush1.msra.mxu0 0.0
    %424 = vmatprep.subr.mxu0 0.0
    %425 = vmatpush1.msra.mxu0 0.0
    %426 = vmatprep.subr.mxu0 0.0
    %427 = vmatpush1.msra.mxu0 0.0
    %428 = vmatprep.subr.mxu0 0.0
    %429 = vmatpush1.msra.mxu0 0.0
    %430 = vmatprep.subr.mxu0 0.0
    %431 = vmatpush1.msra.mxu0 0.0
    %432 = vmatprep.subr.mxu0 0.0
    %433 = vmatpush1.msra.mxu0 0.0
    %434 = vmatprep.subr.mxu0 0.0
    %435 = vmatpush1.msra.mxu0 0.0
    %436 = vmatprep.subr.mxu0 0.0
    %437 = vmatpush1.msra.mxu0 0.0
    %438 = vmatprep.subr.mxu0 0.0
    %439 = vmatpush1.msra.mxu0 0.0
    %440 = vmatprep.mubr.f32.mxu0 0.0
    %441 = vmatmul.mubr.f32.gmra.mrb[0].mxu0 %v371
    %v442 = vpop.f32.mrb[0].mxu0
    %v443 = vadd.f32 0.0, %v442
    %v444 = vpop.f32.mrb[0].mxu0
    %445 = vmatprep.mubr.f32.mxu0 0.0
    %446 = vmatmul.mubr.f32.gmra.mrb[0].mxu0 %v374
    %v447 = vpop.f32.mrb[0].mxu0
    %v448 = vadd.f32 0.0, %v447
    %v449 = vpop.f32.mrb[0].mxu0
    %450 = vdwg.mxu0
    %v451 = vmax.f32 %v443, 0.0
    %v452 = vmax.f32 %v448, 0.0
    %v453 = vld [vmem:[%s3] sm:$0x1]
    %v455 = vlaneseq
    %v456 = vshrl.u32 %v455, 7
    %v457 = vsub.s32 0, %v456
    %v458 = vrot.slane %v453, %v457
    %v460 = vmul.f32 %v451, %v458
    %v461 = vmul.f32 %v452, %v458
    %v462 = vld [vmem:[%s4] sm:$0x1]
    %v464 = vlaneseq
    %v465 = vshrl.u32 %v464, 7
    %v466 = vsub.s32 0, %v465
    %v467 = vrot.slane %v462, %v466
    %v469 = vadd.f32 %v460, %v467
    %v470 = vadd.f32 %v461, %v467
    %471 = vst.msk [vmem:[#allocation2] sm:$0xff] %vm70, %v469
    %472 = vst.msk [vmem:[#allocation2 + $0x8] sm:$0xff] %vm70, %v470
    // Predicated region
    $region50: #{tpu_custom_call.1} parent=1 // pred_check
      _
    $region51: #{tpu_custom_call.1} parent=1 // pred_check_branch
      %474 = sbr.rel (0) target = $region53
    $region52: #{tpu_custom_call.1} parent=1 // pred_region
      %s476 = ssub.s32 256, 256
      %477 = vsyncadd [#allocation3], %s476
      %s478 = sshll.u32 [#allocation2], 4
      %s479 = int_to_ptr.vmem [resolvable:$true] %s478
      %484 = dma.vmem_to_hbm [thread:$0]  %s479, 256, %s12, [#allocation3], 128, 128, 8
    $region53: #{tpu_custom_call.1} parent=1 // pred_fallthru
      _
    // Predicated region
    $region54: #{tpu_custom_call.1} parent=1 // pred_check
      _
    $region55: #{tpu_custom_call.1} parent=1 // pred_check_branch
      %486 = sbr.rel (0) target = $region57
    $region56: #{tpu_custom_call.1} parent=1 // pred_region
      %487 = dma.done [#allocation3], 256
    $region57: #{tpu_custom_call.1} parent=1 // pred_fallthru
      _
    %488 = vsyncpa [#allocation3], 1

</llo_original>
